<compile_context>
chip_gen: v7x
topology: tpu7x:2x2x1
jax: 0.10.0
libtpu: 0.0.40
codegen_flags: <defaults>
</compile_context>

<pallas_src>
import jax
import jax.numpy as jnp
from jax.experimental import pallas as pl
from jax.experimental.pallas import tpu as pltpu

EPS = 1e-5  # nn.LayerNorm default


def _round_up(x, m):
    return (x + m - 1) // m * m


def _vmem_capacity_bytes():
    """Physical VMEM of the local TPU, with a safe 128 MiB fallback."""
    try:
        info = pltpu.get_tpu_info()
        for attr in ("vmem_capacity_bytes", "vmem_bytes", "vmem_size_bytes"):
            v = getattr(info, attr, None)
            if v:
                return int(v)
    except Exception:
        pass
    return 128 * 1024 * 1024  # v5e / v6e


def _select_tiles(rows, d_in, d_out, x_bytes, out_bytes):
    """VMEM-budget-derived (row_tile, col_tile, padded d_out, vmem_budget)."""
    vmem_cap = _vmem_capacity_bytes()
    # Leave headroom for Mosaic-internal scratch; never request all of VMEM.
    budget = min(int(vmem_cap * 0.80), vmem_cap - 12 * 1024 * 1024)
    budget = max(budget, 16 * 1024 * 1024)

    # ---- column tiling of W (output dim) ----
    w_full_bytes = d_in * d_out * 2  # bf16, single-buffered when grid-invariant
    if d_out <= 1024 or w_full_bytes <= budget // 3:
        col_tile = d_out
        d_out_pad = d_out
    else:
        col_tile = None
        for cand in (2048, 1024, 512, 256):
            if d_out % cand == 0 and 2 * (d_in * cand * 2) <= budget // 2:
                col_tile = cand
                break
        if col_tile is None:
            # No clean divisor: pad the output columns instead of keeping the
            # full (D, D) W resident (VMEM-OOM risk on v7x).
            col_tile = 512
            while col_tile > 128 and 2 * (d_in * col_tile * 2) > budget // 2:
                col_tile //= 2
        d_out_pad = _round_up(d_out, col_tile)

    n_col = d_out_pad // col_tile
    w_bufs = 1 if n_col == 1 else 2
    w_bytes = d_in * col_tile * 2 * w_bufs
    bias_bytes = col_tile * 4 * w_bufs
    budget_rows = max(budget - w_bytes - bias_bytes, 0)

    # ---- row tiling ----
    rows8 = _round_up(rows, 8)
    row_tile = 8
    for cand in (1024, 512, 256, 128, 64, 32, 16, 8):
        if cand > rows8:
            continue
        need = (cand * d_in * x_bytes * 2            # x tile, double-buffered
                + cand * col_tile * out_bytes * 2    # out tile, double-buffered
                + cand * d_in * 2)                   # bf16 normed scratch
        if need <= budget_rows:
            row_tile = cand
            break

    # Keep padding waste modest for ragged token counts (<= ~12.5%).
    while row_tile > 64 and (_round_up(rows, row_tile) - rows) * 8 > rows:
        row_tile //= 2
    # Give both TensorCores work on megacore parts (v7x) for small problems.
    while row_tile > 8 and _round_up(rows, row_tile) // row_tile < 2:
        row_tile //= 2

    return row_tile, col_tile, d_out_pad, budget


def prenorm_kernel(x_ref, w_ref, b_ref, o_ref, normed_ref):
    # Grid: (row_tiles, col_tiles).
    #   x_ref:      (row_tile, D)         input dtype (f32 or bf16)
    #   w_ref:      (D, col_tile)         bf16 (gamma pre-folded, cast once)
    #   b_ref:      (1, col_tile)         f32  (beta @ W + b, pre-folded)
    #   o_ref:      (row_tile, col_tile)  input dtype
    #   normed_ref: (row_tile, D)         bf16 scratch, persists across j
    #
    # LayerNorm is computed once per row tile (j == 0) in f32 with a single
    # sweep for the stats, cached in the bf16 scratch, and reused by every
    # column step's MXU matmul (f32 accumulation).
    @pl.when(pl.program_id(1) == 0)
    def _():
        x = x_ref[...].astype(jnp.float32)
        inv_d = 1.0 / x_ref.shape[-1]                      # static
        s1 = jnp.sum(x, axis=-1, keepdims=True)
        s2 = jnp.sum(x * x, axis=-1, keepdims=True)
        mean = s1 * inv_d
        var = jnp.maximum(s2 * inv_d - mean * mean, 0.0)   # biased, like PyTorch
        inv = jax.lax.rsqrt(var + EPS)
        normed_ref[...] = ((x - mean) * inv).astype(normed_ref.dtype)

    y = jnp.dot(normed_ref[...], w_ref[...], preferred_element_type=jnp.float32)
    o_ref[...] = (y + b_ref[...]).astype(o_ref.dtype)


def prenorm_linear(x, gamma, beta, w, b):
    """x: (B, N, D) -> fn(LayerNorm(x)) with fn = Linear(D, D_out)."""
    B, N, D = x.shape
    d_out = w.shape[1]
    rows = B * N
    x2d = x.reshape(rows, D)
    x_bytes = int(jnp.dtype(x.dtype).itemsize)
    out_bytes = x_bytes

    # Fold the LayerNorm affine params into the linear layer (one-time cost):
    #   (normed*gamma + beta) @ W + b == normed @ (gamma[:,None]*W) + (beta@W + b)
    gamma_f = gamma.reshape(D).astype(jnp.float32)
    beta_f = beta.reshape(D).astype(jnp.float32)
    w_f = w.astype(jnp.float32)
    w_eff = (gamma_f[:, None] * w_f).astype(jnp.bfloat16)       # bf16 MXU operand
    b_eff = (beta_f @ w_f + b.astype(jnp.float32)).reshape(1, d_out)

    row_tile, col_tile, d_out_pad, vmem_budget = _select_tiles(
        rows, D, d_out, x_bytes, out_bytes)

    # Row padding so arbitrary B*N works (e.g. ViT's 197 tokens).
    rows_p = _round_up(rows, row_tile)
    if rows_p != rows:
        x2d = jnp.pad(x2d, ((0, rows_p - rows), (0, 0)))
    # Column padding (only when D is large and has no clean col_tile divisor).
    if d_out_pad != d_out:
        w_eff = jnp.pad(w_eff, ((0, 0), (0, d_out_pad - d_out)))
        b_eff = jnp.pad(b_eff, ((0, 0), (0, d_out_pad - d_out)))

    grid = (rows_p // row_tile, d_out_pad // col_tile)
    w_invariant = grid[1] == 1
    # Single-buffer grid-invariant blocks: the second buffer is pure VMEM waste.
    w_pipe = {"pipeline_mode": pl.Buffered(1)} if w_invariant else {}

    cost = pl.CostEstimate(
        flops=2 * rows_p * D * d_out_pad,
        transcendentals=rows_p,  # one rsqrt per row
        bytes_accessed=(rows_p * D * x_bytes            # x
                        + D * d_out_pad * 2             # W (bf16)
                        + d_out_pad * 4                 # bias
                        + rows_p * d_out_pad * out_bytes),  # out
    )

    out2d = pl.pallas_call(
        prenorm_kernel,
        out_shape=jax.ShapeDtypeStruct((rows_p, d_out_pad), x.dtype),
        grid_spec=pltpu.PrefetchScalarGridSpec(
            num_scalar_prefetch=0,
            grid=grid,
            in_specs=[
                pl.BlockSpec((row_tile, D), lambda i, j: (i, 0)),            # x rows
                pl.BlockSpec((D, col_tile), lambda i, j: (0, j), **w_pipe),  # W slab
                pl.BlockSpec((1, col_tile), lambda i, j: (0, j), **w_pipe),  # bias slab
            ],
            out_specs=pl.BlockSpec((row_tile, col_tile), lambda i, j: (i, j)),
            scratch_shapes=[pltpu.VMEM((row_tile, D), jnp.bfloat16)],
        ),
        compiler_params=pltpu.CompilerParams(
            # Row axis is embarrassingly parallel (megacore on v7x); the
            # column axis carries the normed scratch -> "arbitrary".
            dimension_semantics=("parallel", "arbitrary"),
            vmem_limit_bytes=int(vmem_budget),
        ),
        cost_estimate=cost,
    )(x2d, w_eff, b_eff)

    if rows_p != rows or d_out_pad != d_out:
        out2d = out2d[:rows, :d_out]
    return out2d.reshape(B, N, d_out)


def reference(x, gamma, beta, w, b):
    xf = x.astype(jnp.float32)
    mean = jnp.mean(xf, axis=-1, keepdims=True)
    var = jnp.mean((xf - mean) ** 2, axis=-1, keepdims=True)
    normed = (xf - mean) / jnp.sqrt(var + EPS) * gamma + beta
    return normed @ w + b


if __name__ == "__main__":
    key = jax.random.PRNGKey(0)
    B, N, D = 2, 8, 128  # batch=2, seq=8, hidden=128

    k_x, k_w, k_b, k_g, k_be = jax.random.split(key, 5)
    x = jax.random.normal(k_x, (B, N, D), dtype=jnp.float32)

    # LayerNorm params (perturbed from PyTorch init to exercise the fold).
    gamma = jnp.ones((D,), dtype=jnp.float32) + 0.1 * jax.random.normal(k_g, (D,), jnp.float32)
    beta = 0.1 * jax.random.normal(k_be, (D,), dtype=jnp.float32)

    # fn = Linear(D, D), deterministic init.
    w = jax.random.normal(k_w, (D, D), dtype=jnp.float32) * 0.02
    b = jax.random.normal(k_b, (D,), dtype=jnp.float32) * 0.01

    out = prenorm_linear(x, gamma, beta, w, b)
    out = jax.block_until_ready(out)

    ref = reference(x, gamma, beta, w, b)
    # bf16 MXU operands with f32 accumulation -> slightly looser tolerance
    # than the pure-f32 reference.
    assert out.shape == ref.shape, "shape mismatch"
    assert jnp.all(jnp.isfinite(out)), "non-finite output"
    assert jnp.allclose(out, ref, atol=2e-2, rtol=2e-2), "mismatch vs reference"

    print("KERNEL_OK")
</pallas_src>

<mosaic_0001>
module attributes {stable_mosaic.version = 11 : i64} {
  func.func @prenorm_kernel(%arg0: i32, %arg1: i32, %arg2: memref<8x128xf32, #tpu.memory_space<vmem>>, %arg3: memref<128x128xbf16, #tpu.memory_space<vmem>>, %arg4: memref<1x128xf32, #tpu.memory_space<vmem>>, %arg5: memref<8x128xf32, #tpu.memory_space<vmem>>, %arg6: memref<8x128xbf16, #tpu.memory_space<vmem>>) attributes {dimension_semantics = [#tpu.dimension_semantics<parallel>, #tpu.dimension_semantics<arbitrary>], iteration_bounds = array<i64: 2, 1>, scalar_prefetch = 0 : i64, scratch_operands = 1 : i64, tpu.core_type = #tpu.core_type<tc>, window_params = [{transform_indices = @transform_0, window_bounds = array<i64: 8, 128>}, {pipeline_mode = #tpu.pipeline_mode<synchronous>, transform_indices = @transform_1, window_bounds = array<i64: 128, 128>}, {pipeline_mode = #tpu.pipeline_mode<synchronous>, transform_indices = @transform_2, window_bounds = array<i64: 1, 128>}, {transform_indices = @transform_3, window_bounds = array<i64: 8, 128>}]} {
    %c0_i32 = arith.constant 0 : i32
    %0 = arith.cmpi eq, %arg1, %c0_i32 : i32
    %1 = arith.extui %0 : i1 to i32
    %c0_i32_0 = arith.constant 0 : i32
    %2 = arith.cmpi ne, %1, %c0_i32_0 : i32
    scf.if %2 {
      %c0_8 = arith.constant 0 : index
      %c0_9 = arith.constant 0 : index
      %10 = vector.load %arg2[%c0_8, %c0_9] : memref<8x128xf32, #tpu.memory_space<vmem>>, vector<8x128xf32>
      %cst_10 = arith.constant dense<0.000000e+00> : vector<8xf32>
      %11 = vector.multi_reduction <add>, %10, %cst_10 [1] : vector<8x128xf32> to vector<8xf32>
      %12 = vector.shape_cast %11 : vector<8xf32> to vector<8x1xf32>
      %13 = arith.mulf %10, %10 : vector<8x128xf32>
      %cst_11 = arith.constant dense<0.000000e+00> : vector<8xf32>
      %14 = vector.multi_reduction <add>, %13, %cst_11 [1] : vector<8x128xf32> to vector<8xf32>
      %15 = vector.shape_cast %14 : vector<8xf32> to vector<8x1xf32>
      %cst_12 = arith.constant 7.812500e-03 : f32
      %16 = vector.broadcast %cst_12 : f32 to vector<8x1xf32>
      %17 = arith.mulf %12, %16 : vector<8x1xf32>
      %cst_13 = arith.constant 7.812500e-03 : f32
      %18 = vector.broadcast %cst_13 : f32 to vector<8x1xf32>
      %19 = arith.mulf %15, %18 : vector<8x1xf32>
      %20 = arith.mulf %17, %17 : vector<8x1xf32>
      %21 = arith.subf %19, %20 : vector<8x1xf32>
      %cst_14 = arith.constant 0.000000e+00 : f32
      %22 = vector.broadcast %cst_14 : f32 to vector<8x1xf32>
      %23 = arith.maximumf %21, %22 : vector<8x1xf32>
      %cst_15 = arith.constant 9.99999974E-6 : f32
      %24 = vector.broadcast %cst_15 : f32 to vector<8x1xf32>
      %25 = arith.addf %23, %24 : vector<8x1xf32>
      %26 = math.rsqrt %25 : vector<8x1xf32>
      %27 = vector.broadcast %17 : vector<8x1xf32> to vector<8x128xf32>
      %28 = arith.subf %10, %27 : vector<8x128xf32>
      %29 = vector.broadcast %26 : vector<8x1xf32> to vector<8x128xf32>
      %30 = arith.mulf %28, %29 : vector<8x128xf32>
      %31 = arith.truncf %30 : vector<8x128xf32> to vector<8x128xbf16>
      %c0_16 = arith.constant 0 : index
      %c0_17 = arith.constant 0 : index
      %32 = vector.load %arg6[%c0_16, %c0_17] : memref<8x128xbf16, #tpu.memory_space<vmem>>, vector<8x128xbf16>
      tpu.vector_store %arg6[%c0_16, %c0_17], %31 {strides = array<i32>} : memref<8x128xbf16, #tpu.memory_space<vmem>>, vector<8x128xbf16>,
    } else {
    }
    %c0 = arith.constant 0 : index
    %c0_1 = arith.constant 0 : index
    %3 = vector.load %arg6[%c0, %c0_1] : memref<8x128xbf16, #tpu.memory_space<vmem>>, vector<8x128xbf16>
    %c0_2 = arith.constant 0 : index
    %c0_3 = arith.constant 0 : index
    %4 = vector.load %arg3[%c0_2, %c0_3] : memref<128x128xbf16, #tpu.memory_space<vmem>>, vector<128x128xbf16>
    %cst = arith.constant dense<0.000000e+00> : vector<8x128xf32>
    %5 = tpu.matmul %3, %4, %cst {dimension_numbers = #tpu.dot_dimension_numbers<[1], [0], [0], [1], [0, 0, 1, 1], [], []>} : vector<8x128xbf16>, vector<128x128xbf16>, vector<8x128xf32> -> vector<8x128xf32>
    %c0_4 = arith.constant 0 : index
    %c0_5 = arith.constant 0 : index
    %6 = vector.load %arg4[%c0_4, %c0_5] : memref<1x128xf32, #tpu.memory_space<vmem>>, vector<1x128xf32>
    %7 = vector.broadcast %6 : vector<1x128xf32> to vector<8x128xf32>
    %8 = arith.addf %5, %7 : vector<8x128xf32>
    %c0_6 = arith.constant 0 : index
    %c0_7 = arith.constant 0 : index
    %9 = vector.load %arg5[%c0_6, %c0_7] : memref<8x128xf32, #tpu.memory_space<vmem>>, vector<8x128xf32>
    tpu.vector_store %arg5[%c0_6, %c0_7], %8 {strides = array<i32>} : memref<8x128xf32, #tpu.memory_space<vmem>>, vector<8x128xf32>,
    return
  }
  func.func @transform_0(%arg0: i32, %arg1: i32) -> (i32, i32) {
    %c0_i32 = arith.constant 0 : i32
    %c0_i32_0 = arith.constant 0 : i32
    return %arg0, %c0_i32 : i32, i32
  }
  func.func @transform_1(%arg0: i32, %arg1: i32) -> (i32, i32) {
    %c0_i32 = arith.constant 0 : i32
    %c0_i32_0 = arith.constant 0 : i32
    return %c0_i32, %arg1 : i32, i32
  }
  func.func @transform_2(%arg0: i32, %arg1: i32) -> (i32, i32) {
    %c0_i32 = arith.constant 0 : i32
    %c0_i32_0 = arith.constant 0 : i32
    return %c0_i32, %arg1 : i32, i32
  }
  func.func @transform_3(%arg0: i32, %arg1: i32) -> (i32, i32) {
    %c0_i32 = arith.constant 0 : i32
    return %arg0, %arg1 : i32, i32
  }
}

</mosaic_0001>

<llo_original>
// kernel: tpu_custom_call.1
$region0: #{tpu_custom_call.1}
  #allocation0 [shape = 'u32[]', space=smem, size = 0x4, offset = 0x4, fixed_abs, tag = 'smem constant byte address 0x4 - core index']
  #allocation1 [shape = 'u32[144,128]{1,0:T(1,128)}', space=vmem, size = 0x12000, scoped, tag = 'internal scratch']
  #allocation2 [shape = 'bf16[8,128]{1,0:T(8,128)(2,1)}', space=vmem, size = 0x800, scoped, tag = 'scratch operand']
  %s0 = inlined_call_operand.hbm [shape: f32[16,128], index: 0, kind: input, shape index: {}]
  %s1 = inlined_call_operand.hbm [shape: bf16[128,128], index: 1, kind: input, shape index: {}]
  %s2 = inlined_call_operand.hbm [shape: f32[1,128], index: 2, kind: input, shape index: {}]
  %s3 = inlined_call_operand.hbm [shape: f32[16,128], index: 3, kind: output, shape index: {}]
  %s4 = sld [smem:[#allocation0]]
  $region61: #{tpu_custom_call.1} parent=0
    _
  %s6 = ssub.s32 1, %s4
  %s7 = scalar_select 0, %s6, %s4
  $region1: #{tpu_custom_call.1} parent=0
    #allocation3 [shape = 'u8[8192]{0}', space=vmem, size = 0x2000, scoped, tag = 'input window, operand 0']
    #allocation4 [shape = 's32[2]{0}', space=sflag, size = 0x8, scoped, tag = 'scoped memory for tpu_custom_call.1']
    #allocation5 [shape = 's32[2]{0}', space=sflag, size = 0x8, scoped, tag = 'scoped memory for tpu_custom_call.1']
    #allocation6 [shape = 'u8[32768]{0}', space=vmem, size = 0x8000, scoped, tag = 'input window, operand 1, single buffered']
    #allocation7 [shape = 's32[1]{0}', space=sflag, size = 0x4, scoped, tag = 'scoped memory for tpu_custom_call.1']
    #allocation8 [shape = 'u8[512]{0}', space=vmem, size = 0x400, scoped, tag = 'input window, operand 2, single buffered']
    #allocation9 [shape = 'u8[8192]{0}', space=vmem, size = 0x2000, scoped, tag = 'output window, operand 0']
    %8 = vsyncpa [#allocation4], 0
    %s9 = scalar_lea.sflag [#allocation4], 1
    %10 = vsyncpa %s9, 0
    %11 = vsyncpa [#allocation7], 0
    %12 = vsyncpa [#allocation5], 0
    %s13 = scalar_lea.sflag [#allocation5], 1
    %14 = vsyncpa %s13, 0
    loop: start=0, step=1, limit=4
    $region2: #{tpu_custom_call.1} parent=1 // loop_pre_header
      _
    $region3: #{tpu_custom_call.1} parent=1 // loop_header
      %s16 = sphi 0, %s20
      %p17 = scmp.ge.s32.totalorder %s16, 4
      %s23 = sphi 0, %s35
      %s24 = sphi 0, %s31
      %s25 = sphi 0, %s23
      %s26 = sphi 0, %s24
      %s27 = sphi 0, %s25
      %s28 = sphi 0, %s26
      %s38 = sphi 0, %s40
      %s41 = sphi 0, %s38
      %s42 = sphi 0, %s41
      %s58 = sphi 0, %s42
      %s64 = sphi 0, %s66
      %s67 = sphi 0, %s64
      %s68 = sphi 0, %s67
      %s84 = sphi 0, %s68
      %s90 = sphi 0, %s92
      %s93 = sphi 0, %s90
      %s94 = sphi 0, %s93
      %s110 = sphi 0, %s94
      %s118 = sphi 0, %s120
      %s121 = sphi 0, %s118
      %s122 = sphi 0, %s121
      %s138 = sphi 0, %s122
    $region4: #{tpu_custom_call.1} parent=1 // loop_header_branch
      %19 = sbr.rel (%p17) target = $region8
    $region5: #{tpu_custom_call.1} parent=1 // loop_body
      %s21 = ssub.s32 %s16, 1
      %s22 = ssub.s32 %s16, 2
      %s29 = sadd.s32 1, %s24
      %p30 = scmp.ge.s32.totalorder %s29, 1
      %s31 = scalar_select %p30, 0, %s29
      %s32 = sadd.s32 1, %s23
      %s33 = scalar_select %p30, %s32, %s23
      %p34 = scmp.ge.s32.totalorder %s33, 2
      %s35 = scalar_select %p34, 0, %s33
      %s36 = ssub.s32 %s23, %s35
      %p37 = scmp.eq.s32.totalorder %s36, 0
      %s39 = sadd.s32 %s38, 1
      %s40 = scalar_select %p37, %s38, %s39
      %p43 = pneg %p37
      %p44 = scmp.eq.s32.totalorder %s16, 1
      %p45 = por %p43, %p44
      %p46 = scmp.ne.s32.totalorder %s38, %s41
      %p47 = scmp.eq.s32.totalorder %s16, 0
      %p48 = por %p46, %p47
      %p49 = scmp.ne.s32.totalorder %s38, %s41
      %p50 = scmp.eq.s32.totalorder %s21, 1
      %p51 = por %p49, %p50
      %p52 = scmp.ne.s32.totalorder %s41, %s42
      %p53 = scmp.eq.s32.totalorder %s21, 0
      %p54 = por %p52, %p53
      %p55 = scmp.ne.s32.totalorder %s41, %s42
      %p56 = scmp.eq.s32.totalorder %s22, 1
      %p57 = por %p55, %p56
      %p59 = scmp.ne.s32.totalorder %s42, %s58
      %p60 = scmp.eq.s32.totalorder %s22, 0
      %p61 = por %p59, %p60
      %s62 = ssub.s32 %s24, %s31
      %p63 = scmp.eq.s32.totalorder %s62, 0
      %s65 = sadd.s32 %s64, 1
      %s66 = scalar_select %p63, %s64, %s65
      %p69 = pneg %p63
      %p70 = scmp.eq.s32.totalorder %s16, 1
      %p71 = por %p69, %p70
      %p72 = scmp.ne.s32.totalorder %s64, %s67
      %p73 = scmp.eq.s32.totalorder %s16, 0
      %p74 = por %p72, %p73
      %p75 = scmp.ne.s32.totalorder %s64, %s67
      %p76 = scmp.eq.s32.totalorder %s21, 1
      %p77 = por %p75, %p76
      %p78 = scmp.ne.s32.totalorder %s67, %s68
      %p79 = scmp.eq.s32.totalorder %s21, 0
      %p80 = por %p78, %p79
      %p81 = scmp.ne.s32.totalorder %s67, %s68
      %p82 = scmp.eq.s32.totalorder %s22, 1
      %p83 = por %p81, %p82
      %p85 = scmp.ne.s32.totalorder %s68, %s84
      %p86 = scmp.eq.s32.totalorder %s22, 0
      %p87 = por %p85, %p86
      %s88 = ssub.s32 %s24, %s31
      %p89 = scmp.eq.s32.totalorder %s88, 0
      %s91 = sadd.s32 %s90, 1
      %s92 = scalar_select %p89, %s90, %s91
      %p95 = pneg %p89
      %p96 = scmp.eq.s32.totalorder %s16, 1
      %p97 = por %p95, %p96
      %p98 = scmp.ne.s32.totalorder %s90, %s93
      %p99 = scmp.eq.s32.totalorder %s16, 0
      %p100 = por %p98, %p99
      %p101 = scmp.ne.s32.totalorder %s90, %s93
      %p102 = scmp.eq.s32.totalorder %s21, 1
      %p103 = por %p101, %p102
      %p104 = scmp.ne.s32.totalorder %s93, %s94
      %p105 = scmp.eq.s32.totalorder %s21, 0
      %p106 = por %p104, %p105
      %p107 = scmp.ne.s32.totalorder %s93, %s94
      %p108 = scmp.eq.s32.totalorder %s22, 1
      %p109 = por %p107, %p108
      %p111 = scmp.ne.s32.totalorder %s94, %s110
      %p112 = scmp.eq.s32.totalorder %s22, 0
      %p113 = por %p111, %p112
      %s114 = ssub.s32 %s23, %s35
      %s115 = ssub.s32 %s24, %s31
      %s116 = sor.u32 %s114, %s115
      %p117 = scmp.eq.s32.totalorder %s116, 0
      %s119 = sadd.s32 %s118, 1
      %s120 = scalar_select %p117, %s118, %s119
      %p123 = pneg %p117
      %p124 = scmp.eq.s32.totalorder %s16, 1
      %p125 = por %p123, %p124
      %p126 = scmp.ne.s32.totalorder %s118, %s121
      %p127 = scmp.eq.s32.totalorder %s16, 0
      %p128 = por %p126, %p127
      %p129 = scmp.ne.s32.totalorder %s118, %s121
      %p130 = scmp.eq.s32.totalorder %s21, 1
      %p131 = por %p129, %p130
      %p132 = scmp.ne.s32.totalorder %s121, %s122
      %p133 = scmp.eq.s32.totalorder %s21, 0
      %p134 = por %p132, %p133
      %p135 = scmp.ne.s32.totalorder %s121, %s122
      %p136 = scmp.eq.s32.totalorder %s22, 1
      %p137 = por %p135, %p136
      %p139 = scmp.ne.s32.totalorder %s122, %s138
      %p140 = scmp.eq.s32.totalorder %s22, 0
      %p141 = por %p139, %p140
      %p142 = scmp.le.s32.totalorder 1, %s16
      %p143 = scmp.lt.s32.totalorder %s16, 3
      %p144 = pnand %p142, %p143
      %p145 = pneg %p144
      // Predicated region
      $region9: #{tpu_custom_call.1} parent=5 // pred_check
        _
      $region10: #{tpu_custom_call.1} parent=5 // pred_check_branch
        %147 = sbr.rel (%p144) target = $region12
      $region11: #{tpu_custom_call.1} parent=5 // pred_region
        %s148 = ssub.s32 %s16, 1
        // Predicated region
        $region13: #{tpu_custom_call.1} parent=11 // pred_check
          %p149 = pneg %p80
        $region14: #{tpu_custom_call.1} parent=11 // pred_check_branch
          %151 = sbr.rel (%p149) target = $region16
        $region15: #{tpu_custom_call.1} parent=11 // pred_region
          %s153 = ssub.s32 1024, 1024
          %154 = vsyncadd [#allocation7], %s153
          %s155 = smul.addr %s26, 64
          %s156 = scalar_lea.hbm %s1, %s155
          %s157 = sshll.u32 [#allocation6], 4
          %s158 = int_to_ptr.vmem [resolvable:$true] %s157
          %163 = dma.hbm_to_vmem [thread:$0]  %s156, 1024, %s158, [#allocation7], 64, 64, 4
        $region16: #{tpu_custom_call.1} parent=11 // pred_fallthru
          _
        // Predicated region
        $region17: #{tpu_custom_call.1} parent=11 // pred_check
          %p164 = pneg %p106
        $region18: #{tpu_custom_call.1} parent=11 // pred_check_branch
          %166 = sbr.rel (%p164) target = $region20
        $region19: #{tpu_custom_call.1} parent=11 // pred_region
          %s168 = ssub.s32 16, 16
          %169 = vsyncadd [#allocation7], %s168
          %s170 = smul.addr %s26, 16
          %s171 = scalar_lea.hbm %s2, %s170
          %s173 = sshll.u32 [#allocation8], 4
          %s174 = int_to_ptr.vmem [resolvable:$true] %s173
          %176 = dma.hbm_to_vmem [thread:$0]  %s171, 16, %s174, [#allocation7]
        $region20: #{tpu_custom_call.1} parent=11 // pred_fallthru
          _
      $region12: #{tpu_custom_call.1} parent=5 // pred_fallthru
        _
      %p177 = scmp.lt.s32.totalorder %s16, 2
      // Predicated region
      $region21: #{tpu_custom_call.1} parent=5 // pred_check
        %p178 = pneg %p177
      $region22: #{tpu_custom_call.1} parent=5 // pred_check_branch
        %180 = sbr.rel (%p178) target = $region24
      $region23: #{tpu_custom_call.1} parent=5 // pred_region
        // Predicated region
        $region25: #{tpu_custom_call.1} parent=23 // pred_check
          %p181 = pneg %p48
        $region26: #{tpu_custom_call.1} parent=23 // pred_check_branch
          %183 = sbr.rel (%p181) target = $region28
        $region27: #{tpu_custom_call.1} parent=23 // pred_region
          %s184 = sand.u32 %s38, 1
          %s185 = scalar_lea.sflag [#allocation4], %s184
          %s186 = sand.u32 %s38, 1
          %s187 = smul.addr %s186, 8
          %s188 = scalar_lea.vmem [#allocation3], %s187
          %s190 = ssub.s32 128, 128
          %191 = vsyncadd %s185, %s190
          %s192 = smul.addr %s23, 128
          %s193 = scalar_lea.hbm %s0, %s192
          %s195 = sshll.u32 %s188, 4
          %s196 = int_to_ptr.vmem [resolvable:$true] %s195
          %198 = dma.hbm_to_vmem [thread:$0]  %s193, 128, %s196, %s185
        $region28: #{tpu_custom_call.1} parent=23 // pred_fallthru
          _
      $region24: #{tpu_custom_call.1} parent=5 // pred_fallthru
        _
      %p199 = scmp.le.s32.totalorder 1, %s16
      %p200 = scmp.lt.s32.totalorder %s16, 3
      %p201 = pnand %p199, %p200
      %p202 = pneg %p201
      // Predicated region
      $region29: #{tpu_custom_call.1} parent=5 // pred_check
        _
      $region30: #{tpu_custom_call.1} parent=5 // pred_check_branch
        %204 = sbr.rel (%p201) target = $region32
      $region31: #{tpu_custom_call.1} parent=5 // pred_region
        %s205 = ssub.s32 %s16, 1
        %s206 = sand.u32 %s41, 1
        %s207 = scalar_lea.sflag [#allocation4], %s206
        %s208 = sand.u32 %s41, 1
        %s209 = smul.addr %s208, 8
        %s210 = scalar_lea.vmem [#allocation3], %s209
        // Predicated region
        $region33: #{tpu_custom_call.1} parent=31 // pred_check
          %p211 = pneg %p54
        $region34: #{tpu_custom_call.1} parent=31 // pred_check_branch
          %213 = sbr.rel (%p211) target = $region36
        $region35: #{tpu_custom_call.1} parent=31 // pred_region
          %214 = dma.done %s207, 128
        $region36: #{tpu_custom_call.1} parent=31 // pred_fallthru
          _
        // Predicated region
        $region37: #{tpu_custom_call.1} parent=31 // pred_check
          %p215 = pneg %p80
        $region38: #{tpu_custom_call.1} parent=31 // pred_check_branch
          %217 = sbr.rel (%p215) target = $region40
        $region39: #{tpu_custom_call.1} parent=31 // pred_region
          %218 = dma.done [#allocation7], 1024
        $region40: #{tpu_custom_call.1} parent=31 // pred_fallthru
          _
        // Predicated region
        $region41: #{tpu_custom_call.1} parent=31 // pred_check
          %p219 = pneg %p106
        $region42: #{tpu_custom_call.1} parent=31 // pred_check_branch
          %221 = sbr.rel (%p219) target = $region44
        $region43: #{tpu_custom_call.1} parent=31 // pred_region
          %222 = dma.done [#allocation7], 16
        $region44: #{tpu_custom_call.1} parent=31 // pred_fallthru
          _
        %s223 = sand.u32 %s41, 1
        %s224 = scalar_lea.sflag [#allocation4], %s223
        %s225 = sand.u32 %s41, 1
        %s226 = smul.addr %s225, 8
        %s227 = scalar_lea.vmem [#allocation3], %s226
        %p228 = pneg %p54
        %p229 = pneg %p51
        %p230 = pneg %p80
        %p231 = pneg %p77
        %p232 = pneg %p106
        %p233 = pneg %p103
        %p234 = pneg %p134
        %p235 = pneg %p131
        %s236 = sand.u32 %s121, 1
        %s237 = scalar_lea.sflag [#allocation5], %s236
        %s238 = sand.u32 %s121, 1
        %s239 = smul.addr %s238, 8
        %s240 = scalar_lea.vmem [#allocation9], %s239
        %p242 = scmp.eq.s32.totalorder %s26, 0
        // Predicated region
        $region45: #{tpu_custom_call.1} parent=31 // pred_check
          %p243 = pneg %p242
        $region46: #{tpu_custom_call.1} parent=31 // pred_check_branch
          %245 = sbr.rel (%p243) target = $region48
        $region47: #{tpu_custom_call.1} parent=31 // pred_region
          %v246 = vld [vmem:[%s210] sm:$0xff]
          %247 = vadd.xlane.f32.xlu0 %v246
          %v248 = vpop.xlane.xlu0 %247
          %v249 = vmul.f32 %v246, %v246
          %250 = vadd.xlane.f32.xlu0 %v249
          %v251 = vpop.xlane.xlu0 %250
          %v252 = vmul.f32 %v248, 0.0078125
          %v253 = vmul.f32 %v251, 0.0078125
          %v254 = vmul.f32 %v252, %v252
          %v255 = vsub.f32 %v253, %v254
          %v256 = vmax.f32 %v255, 0.0
          %v257 = vadd.f32 %v256, 1e-05
          %v258 = vrsqrt.pop %v257
          %v259 = vsub.f32 %v246, %v252
          %v260 = vmul.f32 %v259, %v258
          %v261 = vpack.c.bf16 %v260, %v260
          %262 = vst [vmem:[#allocation2] sm:$0xf] %v261
        $region48: #{tpu_custom_call.1} parent=31 // pred_fallthru
          _
        %v263 = vld [vmem:[#allocation2] sm:$0xf]
        %v264 = vld [vmem:[#allocation6] sm:$0xf]
        %v265 = vld [vmem:[#allocation6 + $0x4] sm:$0xf]
        %v266 = vld [vmem:[#allocation6 + $0x8] sm:$0xf]
        %v267 = vld [vmem:[#allocation6 + $0xc] sm:$0xf]
        %v268 = vld [vmem:[#allocation6 + $0x10] sm:$0xf]
        %v269 = vld [vmem:[#allocation6 + $0x14] sm:$0xf]
        %v270 = vld [vmem:[#allocation6 + $0x18] sm:$0xf]
        %v271 = vld [vmem:[#allocation6 + $0x1c] sm:$0xf]
        %v272 = vld [vmem:[#allocation6 + $0x20] sm:$0xf]
        %v273 = vld [vmem:[#allocation6 + $0x24] sm:$0xf]
        %v274 = vld [vmem:[#allocation6 + $0x28] sm:$0xf]
        %v275 = vld [vmem:[#allocation6 + $0x2c] sm:$0xf]
        %v276 = vld [vmem:[#allocation6 + $0x30] sm:$0xf]
        %v277 = vld [vmem:[#allocation6 + $0x34] sm:$0xf]
        %v278 = vld [vmem:[#allocation6 + $0x38] sm:$0xf]
        %v279 = vld [vmem:[#allocation6 + $0x3c] sm:$0xf]
        %v280 = vld [vmem:[#allocation8] sm:$0x1]
        %v282 = vlaneseq
        %v283 = vshrl.u32 %v282, 7
        %v284 = vsub.s32 0, %v283
        %v285 = vrot.slane %v280, %v284
        %v303 = vunpack.c.l.b16 %v264
        %v304 = vunpack.c.l.b16 %v265
        %v305 = vunpack.c.l.b16 %v266
        %v306 = vunpack.c.l.b16 %v267
        %v307 = vunpack.c.l.b16 %v268
        %v308 = vunpack.c.l.b16 %v269
        %v309 = vunpack.c.l.b16 %v270
        %v310 = vunpack.c.l.b16 %v271
        %v311 = vunpack.c.l.b16 %v272
        %v312 = vunpack.c.l.b16 %v273
        %v313 = vunpack.c.l.b16 %v274
        %v314 = vunpack.c.l.b16 %v275
        %v315 = vunpack.c.l.b16 %v276
        %v316 = vunpack.c.l.b16 %v277
        %v317 = vunpack.c.l.b16 %v278
        %v318 = vunpack.c.l.b16 %v279
        %v319 = vpack.c.b16 %v304, %v303
        %v320 = vpack.c.b16 %v306, %v305
        %v321 = vpack.c.b16 %v308, %v307
        %v322 = vpack.c.b16 %v310, %v309
        %v323 = vpack.c.b16 %v312, %v311
        %v324 = vpack.c.b16 %v314, %v313
        %v325 = vpack.c.b16 %v316, %v315
        %v326 = vpack.c.b16 %v318, %v317
        %335 = vmatprep.subr.bf16.mxu0 0
        %336 = vmatpush1.bf16.msra.mxu0 %v319
        %337 = vmatprep.subr.bf16.mxu0 0
        %338 = vmatpush1.bf16.msra.mxu0 %v320
        %339 = vmatprep.subr.bf16.mxu0 0
        %340 = vmatpush1.bf16.msra.mxu0 %v321
        %341 = vmatprep.subr.bf16.mxu0 0
        %342 = vmatpush1.bf16.msra.mxu0 %v322
        %343 = vmatprep.subr.bf16.mxu0 0
        %344 = vmatpush1.bf16.msra.mxu0 %v323
        %345 = vmatprep.subr.bf16.mxu0 0
        %346 = vmatpush1.bf16.msra.mxu0 %v324
        %347 = vmatprep.subr.bf16.mxu0 0
        %348 = vmatpush1.bf16.msra.mxu0 %v325
        %349 = vmatprep.subr.bf16.mxu0 0
        %350 = vmatpush1.bf16.msra.mxu0 %v326
        %351 = vmatprep.subr.bf16.mxu0 0
        %352 = vmatpush1.bf16.msra.mxu0 0
        %353 = vmatprep.subr.bf16.mxu0 0
        %354 = vmatpush1.bf16.msra.mxu0 0
        %355 = vmatprep.subr.bf16.mxu0 0
        %356 = vmatpush1.bf16.msra.mxu0 0
        %357 = vmatprep.subr.bf16.mxu0 0
        %358 = vmatpush1.bf16.msra.mxu0 0
        %359 = vmatprep.subr.bf16.mxu0 0
        %360 = vmatpush1.bf16.msra.mxu0 0
        %361 = vmatprep.subr.bf16.mxu0 0
        %362 = vmatpush1.bf16.msra.mxu0 0
        %363 = vmatprep.subr.bf16.mxu0 0
        %364 = vmatpush1.bf16.msra.mxu0 0
        %365 = vmatprep.subr.bf16.mxu0 0
        %366 = vmatpush1.bf16.msra.mxu0 0
        %367 = vmatprep.mubr.bf16.mxu0 0
        %368 = vmatmul.mubr.bf16.gmra.mrb[0].mxu0 %v263
        %v369 = vpop.f32.mrb[0].mxu0
        %v370 = vadd.f32 %v285, %v369
        %v371 = vpop.f32.mrb[0].mxu0
        %v372 = vpop.f32.mrb[0].mxu0
        %v373 = vpop.f32.mrb[0].mxu0
        %374 = vdwg.mxu0
        %375 = vst [vmem:[%s240] sm:$0xff] %v370
        %s376 = sand.u32 %s121, 1
        %s377 = scalar_lea.sflag [#allocation5], %s376
        %s378 = sand.u32 %s121, 1
        %s379 = smul.addr %s378, 8
        %s380 = scalar_lea.vmem [#allocation9], %s379
        // Predicated region
        $region49: #{tpu_custom_call.1} parent=31 // pred_check
          %p381 = pneg %p131
        $region50: #{tpu_custom_call.1} parent=31 // pred_check_branch
          %383 = sbr.rel (%p381) target = $region52
        $region51: #{tpu_custom_call.1} parent=31 // pred_region
          %s385 = ssub.s32 128, 128
          %386 = vsyncadd %s377, %s385
          %s387 = sadd.s32 %s26, %s25
          %s388 = smul.addr %s387, 128
          %s389 = scalar_lea.hbm %s3, %s388
          %s391 = sshll.u32 %s380, 4
          %s392 = int_to_ptr.vmem [resolvable:$true] %s391
          %394 = dma.vmem_to_hbm [thread:$0]  %s392, 128, %s389, %s377
        $region52: #{tpu_custom_call.1} parent=31 // pred_fallthru
          _
      $region32: #{tpu_custom_call.1} parent=5 // pred_fallthru
        _
      %p395 = scmp.le.s32.totalorder 2, %s16
      // Predicated region
      $region53: #{tpu_custom_call.1} parent=5 // pred_check
        %p396 = pneg %p395
      $region54: #{tpu_custom_call.1} parent=5 // pred_check_branch
        %398 = sbr.rel (%p396) target = $region56
      $region55: #{tpu_custom_call.1} parent=5 // pred_region
        %s399 = ssub.s32 %s16, 2
        // Predicated region
        $region57: #{tpu_custom_call.1} parent=55 // pred_check
          %p400 = pneg %p137
        $region58: #{tpu_custom_call.1} parent=55 // pred_check_branch
          %402 = sbr.rel (%p400) target = $region60
        $region59: #{tpu_custom_call.1} parent=55 // pred_region
          %s403 = sand.u32 %s122, 1
          %s404 = scalar_lea.sflag [#allocation5], %s403
          %s405 = sand.u32 %s122, 1
          %s406 = smul.addr %s405, 8
          %s407 = scalar_lea.vmem [#allocation9], %s406
          %408 = dma.done %s404, 128
        $region60: #{tpu_custom_call.1} parent=55 // pred_fallthru
          _
      $region56: #{tpu_custom_call.1} parent=5 // pred_fallthru
        _
    $region6: #{tpu_custom_call.1} parent=1 // loop_footer
      %s20 = sadd.s32 1, %s16
    $region7: #{tpu_custom_call.1} parent=1 // loop_footer_branch
      %15 = sbr.rel target = $region3
    $region8: #{tpu_custom_call.1} parent=1 // loop_exit
      _
    %409 = vsyncpa [#allocation4], 1
    %s410 = scalar_lea.sflag [#allocation4], 1
    %411 = vsyncpa %s410, 1
    %412 = vsyncpa [#allocation7], 1
    %413 = vsyncpa [#allocation5], 1
    %s414 = scalar_lea.sflag [#allocation5], 1
    %415 = vsyncpa %s414, 1

</llo_original>
